<compile_context>
chip_gen: v7x
topology: tpu7x:2x2x1
jax: 0.10.0
libtpu: 0.0.40
codegen_flags: <defaults>
</compile_context>

<pallas_src>
import jax
import jax.numpy as jnp
from jax.experimental import pallas as pl
from jax.experimental.pallas import tpu as pltpu


# ----------------------------------------------------------------------------
# small helpers
# ----------------------------------------------------------------------------
def _round_up(x, m):
    return (x + m - 1) // m * m


def _device_kind():
    try:
        return jax.devices()[0].device_kind.lower()
    except Exception:
        return ""


def _default_b_tile(B):
    kind = _device_kind()
    if "v6" in kind:
        cap = 256       # 2x256^2 MXU + 128 MiB VMEM: bigger M halves grid steps
    elif "v5" in kind:
        cap = 128       # 4x128^2 MXU already saturated at M=128
    else:
        cap = 128       # v7x / unknown: 64 MiB VMEM -> keep tiles modest
    return max(16, min(cap, _round_up(max(B, 1), 16)))


def _default_vmem_limit():
    kind = _device_kind()
    if "v6" in kind:
        return 96 * 1024 * 1024
    if "v5" in kind:
        return 64 * 1024 * 1024
    return 48 * 1024 * 1024     # v7x: 64 MiB physical VMEM -> leave headroom


# ----------------------------------------------------------------------------
# Pallas kernel: LSTM recurrence (hh matmul only) + VPU attention + masked sum.
# Grid: (B tiles [parallel], T chunks [arbitrary]).
# ----------------------------------------------------------------------------
def char_lstm_attn(ih_gates_tbg, wordlens, w_hh_bf16, bias_row, attn_row,
                   *, b_tile=None, t_chunk=8):
    """LSTM recurrence + attention-weighted masked sum over time.

    ih_gates_tbg : [T, B, 4H] bf16   precomputed x @ W_ih^T (no bias)
    wordlens     : [B] int32, sorted non-increasing (pack_padded_sequence contract)
    w_hh_bf16    : [H, 4H] bf16      W_hh^T
    bias_row     : [1, 4H] f32       b_ih + b_hh
    attn_row     : [1, H]  f32       char_attn.weight
    returns      : [B, H]  f32       sum_t mask * sigmoid(h_t @ attn) * h_t
    """
    T, B, G = ih_gates_tbg.shape
    H = G // 4
    assert w_hh_bf16.shape == (H, G)
    assert bias_row.shape == (1, G)
    assert attn_row.shape == (1, H)

    if b_tile is None:
        b_tile = _default_b_tile(B)
    # bf16 sublane tile is 16 -> keep the word-batch tile a multiple of 16.
    b_tile = max(16, _round_up(min(b_tile, _round_up(B, 16)), 16))

    # Pad the word batch (padded words get wordlen 0, preserving the
    # non-increasing sort; they contribute nothing).
    Bp = _round_up(B, b_tile)
    wordlens = wordlens.astype(jnp.int32)
    if Bp != B:
        ih_gates_tbg = jnp.pad(ih_gates_tbg, ((0, 0), (0, Bp - B), (0, 0)))
        wordlens = jnp.pad(wordlens, (0, Bp - B))

    # Pad time to a multiple of t_chunk (dead chunks are never DMA'd/computed).
    t_chunk = max(1, min(t_chunk, T))
    Tp = _round_up(T, t_chunk)
    if Tp != T:
        ih_gates_tbg = jnp.pad(ih_gates_tbg, ((0, Tp - T), (0, 0), (0, 0)))

    n_tiles = Bp // b_tile
    n_chunks = Tp // t_chunk

    # Round-robin tile->core assignment (v7x megacore balance): tiles are
    # length-sorted, so contiguous halves would give one core all long words.
    interleave = (n_tiles % 2 == 0) and (n_tiles >= 4)

    def phys_tile(i):
        if interleave:
            return (i % 2) * (n_tiles // 2) + i // 2
        return i

    def chunk_idx(i, k, wl):
        # Clamp dead chunks to the last live chunk index so the block index
        # repeats and Pallas skips the HBM->VMEM DMA entirely.
        t_max = wl[phys_tile(i) * b_tile]
        last_live = jnp.maximum(pl.cdiv(t_max, t_chunk) - 1, 0)
        return jnp.minimum(k, last_live)

    def kernel(wl_smem,      # [Bp]              int32  SMEM (scalar prefetch)
               ih_ref,       # [t_chunk, Bt, 4H] bf16
               wl_ref,       # [Bt, 1]           int32
               w_hh_ref,     # [H, 4H]           bf16
               bias_ref,     # [1, 4H]           f32
               attn_ref,     # [1, H]            f32
               out_ref,      # [Bt, H]           f32
               h_scr, c_scr, acc_scr):
        i = pl.program_id(0)
        k = pl.program_id(1)
        t_max = wl_smem[phys_tile(i) * b_tile]   # tile's max length (sorted desc)
        t_start = k * t_chunk
        steps = jnp.clip(t_max - t_start, 0, t_chunk)

        @pl.when(k == 0)
        def _():
            # charlstm_h_init / charlstm_c_init are zero-initialized parameters.
            h_scr[...] = jnp.zeros_like(h_scr)
            c_scr[...] = jnp.zeros_like(c_scr)
            acc_scr[...] = jnp.zeros_like(acc_scr)

        @pl.when(steps > 0)
        def _():
            wl_vec = wl_ref[...]                               # [Bt, 1] i32
            w_hh = w_hh_ref[...]                               # [H, 4H] bf16
            # Hoist broadcasts out of the serial loop (no per-step broadcast op).
            bias_b = jnp.broadcast_to(bias_ref[...], (b_tile, G))
            attn_b = jnp.broadcast_to(attn_ref[...], (b_tile, H))

            # NOTE: holding W_hh in the MXU staging registers across the loop
            # (pltpu.matmul_push_rhs / matmul_acc_lhs) is a further micro-opt;
            # omitted here for portability.
            def step(t, carry):
                h_bf, c, acc = carry
                x = ih_ref[t].astype(jnp.float32)              # [Bt, 4H]
                gates = jnp.dot(h_bf, w_hh,
                                preferred_element_type=jnp.float32) + x + bias_b
                # TODO(synk): on v6e/v7x the gate nonlinearities could run in
                # bf16 (bf16 VALU/EUP); kept f32 for v5e portability/accuracy.
                i_g = jax.nn.sigmoid(gates[:, 0 * H:1 * H])
                f_g = jax.nn.sigmoid(gates[:, 1 * H:2 * H])
                g_g = jnp.tanh(gates[:, 2 * H:3 * H])
                o_g = jax.nn.sigmoid(gates[:, 3 * H:4 * H])
                c_new = f_g * c + i_g * g_g
                h_new = o_g * jnp.tanh(c_new)
                # Attention gate: VPU multiply + lane reduce (no N=1 MXU matmul).
                w = jax.nn.sigmoid(
                    jnp.sum(h_new * attn_b, axis=-1, keepdims=True))   # [Bt, 1]
                m = (wl_vec > (t_start + t)).astype(jnp.float32)       # [Bt, 1]
                return (h_new.astype(jnp.bfloat16), c_new, acc + m * w * h_new)

            carry0 = (h_scr[...], c_scr[...], acc_scr[...])
            h_out, c_out, acc_out = jax.lax.fori_loop(0, steps, step, carry0)
            h_scr[...] = h_out
            c_scr[...] = c_out
            acc_scr[...] = acc_out

        @pl.when(k == pl.num_programs(1) - 1)
        def _():
            out_ref[...] = acc_scr[...]

    grid_spec = pltpu.PrefetchScalarGridSpec(
        num_scalar_prefetch=1,                       # wordlens -> SMEM
        grid=(n_tiles, n_chunks),
        in_specs=[
            pl.BlockSpec((t_chunk, b_tile, G),
                         lambda i, k, wl: (chunk_idx(i, k, wl), phys_tile(i), 0)),
            pl.BlockSpec((b_tile, 1), lambda i, k, wl: (phys_tile(i), 0)),
            pl.BlockSpec((H, G), lambda i, k, wl: (0, 0)),
            pl.BlockSpec((1, G), lambda i, k, wl: (0, 0)),
            pl.BlockSpec((1, H), lambda i, k, wl: (0, 0)),
        ],
        out_specs=pl.BlockSpec((b_tile, H), lambda i, k, wl: (phys_tile(i), 0)),
        scratch_shapes=[
            pltpu.VMEM((b_tile, H), jnp.bfloat16),   # h (bf16: feeds the MXU)
            pltpu.VMEM((b_tile, H), jnp.float32),    # c
            pltpu.VMEM((b_tile, H), jnp.float32),    # attention-weighted sum
        ],
    )

    out = pl.pallas_call(
        kernel,
        out_shape=jax.ShapeDtypeStruct((Bp, H), jnp.float32),
        grid_spec=grid_spec,
        compiler_params=pltpu.CompilerParams(
            dimension_semantics=("parallel", "arbitrary"),
            vmem_limit_bytes=_default_vmem_limit()),
    )(wordlens, ih_gates_tbg, wordlens[:, None], w_hh_bf16, bias_row, attn_row)
    return out[:B]


# ----------------------------------------------------------------------------
# Pure-JAX f32 reference for the kernel's portion (correctness check).
# ----------------------------------------------------------------------------
def _reference_word_reps(emb_table, w_ih_t, w_hh_t, bias, attn_w, chars, wordlens):
    B, T = chars.shape
    H = w_hh_t.shape[0]
    embs = emb_table[chars]                                           # [B, T, E]
    mask = (jnp.arange(T)[None, :] < wordlens[:, None]).astype(jnp.float32)
    h = jnp.zeros((B, H), jnp.float32)
    c = jnp.zeros((B, H), jnp.float32)
    acc = jnp.zeros((B, H), jnp.float32)
    for t in range(T):
        x = embs[:, t, :]
        gates = x @ w_ih_t + h @ w_hh_t + bias
        i = jax.nn.sigmoid(gates[:, :H])
        f = jax.nn.sigmoid(gates[:, H:2 * H])
        g = jnp.tanh(gates[:, 2 * H:3 * H])
        o = jax.nn.sigmoid(gates[:, 3 * H:4 * H])
        c = f * c + i * g
        h = o * jnp.tanh(c)
        w = jax.nn.sigmoid(h @ attn_w)
        acc = acc + mask[:, t:t + 1] * w * h
    return acc


# ----------------------------------------------------------------------------
# Full forward: embedding gather + hoisted input projection (plain-JAX glue),
# Pallas recurrence kernel, unsort, sentence re-pack + pad.
# ----------------------------------------------------------------------------
def character_model_forward(params, chars, wordlens, word_orig_idx, sentlens,
                            *, b_tile=None, t_chunk=8):
    # TODO(synk): dropout is identity here (eval mode); training-mode dropout not modeled.
    emb_table, w_ih_t, w_hh_t, bias, attn_w = params
    B, T = chars.shape
    E = emb_table.shape[1]
    H = w_hh_t.shape[0]

    # Pad the hidden dim so the four gate slices are lane (128) aligned.
    # Zero-padded gate columns stay exactly zero through the recurrence.
    Hp = _round_up(H, 128)

    def pad_gates(a):   # [..., 4H] -> [..., 4Hp], per-gate zero pad
        a4 = a.reshape(a.shape[:-1] + (4, H))
        a4 = jnp.pad(a4, [(0, 0)] * (a4.ndim - 1) + [(0, Hp - H)])
        return a4.reshape(a.shape[:-1] + (4 * Hp,))

    w_ih_tp = pad_gates(w_ih_t)                                     # [E, 4Hp]
    w_hh_tp = pad_gates(jnp.pad(w_hh_t, ((0, Hp - H), (0, 0))))     # [Hp, 4Hp]
    bias_p = pad_gates(bias)                                        # [1, 4Hp]
    attn_p = jnp.pad(attn_w.reshape(1, H), ((0, 0), (0, Hp - H)))   # [1, Hp]

    # Time-major embedding gather (transpose fused into the gather indices).
    embs_tbe = jnp.take(emb_table, chars.T, axis=0)                 # [T, B, E]

    # Hoisted input projection: one bf16 MXU matmul; the [T, B, 4Hp] activation
    # stream is stored in bf16 (halves HBM traffic), bias is added in-kernel.
    ih_gates = jnp.dot(embs_tbe.reshape(T * B, E).astype(jnp.bfloat16),
                       w_ih_tp.astype(jnp.bfloat16),
                       preferred_element_type=jnp.float32)
    ih_gates = ih_gates.astype(jnp.bfloat16).reshape(T, B, 4 * Hp)

    res_sorted_p = char_lstm_attn(ih_gates,
                                  wordlens.astype(jnp.int32),
                                  w_hh_tp.astype(jnp.bfloat16),
                                  bias_p.astype(jnp.float32),
                                  attn_p.astype(jnp.float32),
                                  b_tile=b_tile, t_chunk=t_chunk)    # [B, Hp]
    res_sorted = res_sorted_p[:, :H]

    # tensor_unsort: place sorted row j back at original position word_orig_idx[j]
    res_unsorted = res_sorted[jnp.argsort(word_orig_idx)]

    # pack_sequence(res.split(sentlens)) + pad_packed_sequence(batch_first=True):
    # one flat scatter instead of a per-sentence dynamic-update-slice loop.
    n_sent = len(sentlens)
    max_len = max(sentlens)
    rows = jnp.concatenate(
        [s * max_len + jnp.arange(sl, dtype=jnp.int32)
         for s, sl in enumerate(sentlens)])
    out = jnp.zeros((n_sent * max_len, H), jnp.float32).at[rows].set(res_unsorted)
    out = out.reshape(n_sent, max_len, H)
    return out, res_sorted


if __name__ == "__main__":
    key = jax.random.PRNGKey(0)

    def make_params(k, V, E, H):
        k_emb, k_ih, k_hh, k_b, k_attn = jax.random.split(k, 5)
        emb = jax.random.normal(k_emb, (V, E), jnp.float32) * 0.1
        emb = emb.at[0].set(0.0)                                 # padding_idx=0
        w_ih_t = jax.random.normal(k_ih, (E, 4 * H), jnp.float32) * 0.08
        w_hh_t = jax.random.normal(k_hh, (H, 4 * H), jnp.float32) * 0.08
        bias = jax.random.normal(k_b, (1, 4 * H), jnp.float32) * 0.08
        attn_w = jax.random.normal(k_attn, (H, 1), jnp.float32) * 0.1
        return (emb, w_ih_t, w_hh_t, bias, attn_w)

    def make_inputs(k, V, B, T):
        k_len, k_chars, k_perm = jax.random.split(k, 3)
        # pack_padded_sequence contract: wordlens sorted non-increasing.
        wordlens = jnp.sort(
            jax.random.randint(k_len, (B,), 1, T + 1, jnp.int32))[::-1]
        chars = jax.random.randint(k_chars, (B, T), 1, V, jnp.int32)
        t_idx = jnp.arange(T, dtype=jnp.int32)
        chars = jnp.where(t_idx[None, :] < wordlens[:, None], chars, 0)
        word_orig_idx = jax.random.permutation(
            k_perm, jnp.arange(B, dtype=jnp.int32))
        return chars, wordlens, word_orig_idx

    k1, k2 = jax.random.split(key)

    # ---- config 1: lane-aligned H, single B tile, single T chunk -----------
    V1, E1, H1, B1, T1 = 64, 32, 128, 8, 8
    params1 = make_params(k1, V1, E1, H1)
    chars1, wordlens1, orig1 = make_inputs(jax.random.fold_in(k1, 1), V1, B1, T1)
    sentlens1 = [3, 3, 2]
    out1, res1 = character_model_forward(params1, chars1, wordlens1, orig1,
                                         sentlens1)
    out1 = jax.block_until_ready(out1)
    ref1 = _reference_word_reps(*params1, chars1, wordlens1)
    assert out1.shape == (len(sentlens1), max(sentlens1), H1)
    assert jnp.allclose(res1, ref1, rtol=2e-2, atol=2e-2), "config1 kernel mismatch"

    # ---- config 2: H padded 64->128, 4 interleaved B tiles, 3 T chunks -----
    V2, E2, H2, B2, T2 = 48, 24, 64, 64, 10
    params2 = make_params(k2, V2, E2, H2)
    chars2, wordlens2, orig2 = make_inputs(jax.random.fold_in(k2, 1), V2, B2, T2)
    sentlens2 = [12, 11, 10, 9, 8, 7, 4, 3]                 # sums to 64
    out2, res2 = character_model_forward(params2, chars2, wordlens2, orig2,
                                         sentlens2, b_tile=16, t_chunk=4)
    out2 = jax.block_until_ready(out2)
    ref2 = _reference_word_reps(*params2, chars2, wordlens2)
    assert out2.shape == (len(sentlens2), max(sentlens2), H2)
    assert jnp.allclose(res2, ref2, rtol=2e-2, atol=2e-2), "config2 kernel mismatch"

    # re-pack (unsort + pack_sequence + pad) check for config 2
    res_unsorted2 = res2[jnp.argsort(orig2)]
    off = 0
    for s, sl in enumerate(sentlens2):
        assert jnp.allclose(out2[s, :sl], res_unsorted2[off:off + sl])
        assert bool(jnp.all(out2[s, sl:] == 0))
        off += sl

    print("KERNEL_OK")
</pallas_src>

<mosaic_0001>
module attributes {stable_mosaic.version = 11 : i64} {
  func.func @kernel(%arg0: i32, %arg1: i32, %arg2: memref<16xi32, #tpu.memory_space<smem>>, %arg3: memref<8x16x512xbf16, #tpu.memory_space<vmem>>, %arg4: memref<16x1xi32, #tpu.memory_space<vmem>>, %arg5: memref<128x512xbf16, #tpu.memory_space<vmem>>, %arg6: memref<1x512xf32, #tpu.memory_space<vmem>>, %arg7: memref<1x128xf32, #tpu.memory_space<vmem>>, %arg8: memref<16x128xf32, #tpu.memory_space<vmem>>, %arg9: memref<16x128xbf16, #tpu.memory_space<vmem>>, %arg10: memref<16x128xf32, #tpu.memory_space<vmem>>, %arg11: memref<16x128xf32, #tpu.memory_space<vmem>>) attributes {dimension_semantics = [#tpu.dimension_semantics<parallel>, #tpu.dimension_semantics<arbitrary>], iteration_bounds = array<i64: 1, 1>, scalar_prefetch = 1 : i64, scratch_operands = 3 : i64, tpu.core_type = #tpu.core_type<tc>, window_params = [{transform_indices = @transform_0, window_bounds = array<i64: 8, 16, 512>}, {transform_indices = @transform_1, window_bounds = array<i64: 16, 1>}, {pipeline_mode = #tpu.pipeline_mode<synchronous>, transform_indices = @transform_2, window_bounds = array<i64: 128, 512>}, {pipeline_mode = #tpu.pipeline_mode<synchronous>, transform_indices = @transform_3, window_bounds = array<i64: 1, 512>}, {pipeline_mode = #tpu.pipeline_mode<synchronous>, transform_indices = @transform_4, window_bounds = array<i64: 1, 128>}, {transform_indices = @transform_5, window_bounds = array<i64: 16, 128>}]} {
    %c16_i32 = arith.constant 16 : i32
    %0 = arith.muli %arg0, %c16_i32 : i32
    %1 = arith.index_cast %0 : i32 to index
    %2 = memref.load %arg2[%1] : memref<16xi32, #tpu.memory_space<smem>>
    %c8_i32 = arith.constant 8 : i32
    %3 = arith.muli %arg1, %c8_i32 : i32
    %4 = arith.subi %2, %3 : i32
    %c0_i32 = arith.constant 0 : i32
    %c8_i32_0 = arith.constant 8 : i32
    %5 = arith.maxsi %c0_i32, %4 : i32
    %6 = arith.minsi %c8_i32_0, %5 : i32
    %c0_i32_1 = arith.constant 0 : i32
    %7 = arith.cmpi eq, %arg1, %c0_i32_1 : i32
    %8 = arith.extui %7 : i1 to i32
    %c0_i32_2 = arith.constant 0 : i32
    %9 = arith.cmpi ne, %8, %c0_i32_2 : i32
    scf.if %9 {
      %cst = arith.constant 0.000000e+00 : bf16
      %16 = vector.broadcast %cst : bf16 to vector<16x128xbf16>
      %c0 = arith.constant 0 : index
      %c0_7 = arith.constant 0 : index
      %17 = vector.load %arg9[%c0, %c0_7] : memref<16x128xbf16, #tpu.memory_space<vmem>>, vector<16x128xbf16>
      tpu.vector_store %arg9[%c0, %c0_7], %16 {strides = array<i32>} : memref<16x128xbf16, #tpu.memory_space<vmem>>, vector<16x128xbf16>,
      %cst_8 = arith.constant 0.000000e+00 : f32
      %18 = vector.broadcast %cst_8 : f32 to vector<16x128xf32>
      %c0_9 = arith.constant 0 : index
      %c0_10 = arith.constant 0 : index
      %19 = vector.load %arg10[%c0_9, %c0_10] : memref<16x128xf32, #tpu.memory_space<vmem>>, vector<16x128xf32>
      tpu.vector_store %arg10[%c0_9, %c0_10], %18 {strides = array<i32>} : memref<16x128xf32, #tpu.memory_space<vmem>>, vector<16x128xf32>,
      %cst_11 = arith.constant 0.000000e+00 : f32
      %20 = vector.broadcast %cst_11 : f32 to vector<16x128xf32>
      %c0_12 = arith.constant 0 : index
      %c0_13 = arith.constant 0 : index
      %21 = vector.load %arg11[%c0_12, %c0_13] : memref<16x128xf32, #tpu.memory_space<vmem>>, vector<16x128xf32>
      tpu.vector_store %arg11[%c0_12, %c0_13], %20 {strides = array<i32>} : memref<16x128xf32, #tpu.memory_space<vmem>>, vector<16x128xf32>,
    } else {
    }
    %c0_i32_3 = arith.constant 0 : i32
    %10 = arith.cmpi sgt, %6, %c0_i32_3 : i32
    %11 = arith.extui %10 : i1 to i32
    %c0_i32_4 = arith.constant 0 : i32
    %12 = arith.cmpi ne, %11, %c0_i32_4 : i32
    scf.if %12 {
      %c0 = arith.constant 0 : index
      %c0_7 = arith.constant 0 : index
      %16 = vector.load %arg4[%c0, %c0_7] : memref<16x1xi32, #tpu.memory_space<vmem>>, vector<16x1xi32>
      %c0_8 = arith.constant 0 : index
      %c0_9 = arith.constant 0 : index
      %17 = vector.load %arg5[%c0_8, %c0_9] : memref<128x512xbf16, #tpu.memory_space<vmem>>, vector<128x512xbf16>
      %c0_10 = arith.constant 0 : index
      %c0_11 = arith.constant 0 : index
      %18 = vector.load %arg6[%c0_10, %c0_11] : memref<1x512xf32, #tpu.memory_space<vmem>>, vector<1x512xf32>
      %19 = vector.shape_cast %18 : vector<1x512xf32> to vector<1x512xf32>
      %20 = vector.broadcast %19 : vector<1x512xf32> to vector<16x512xf32>
      %c0_12 = arith.constant 0 : index
      %c0_13 = arith.constant 0 : index
      %21 = vector.load %arg7[%c0_12, %c0_13] : memref<1x128xf32, #tpu.memory_space<vmem>>, vector<1x128xf32>
      %22 = vector.shape_cast %21 : vector<1x128xf32> to vector<1x128xf32>
      %23 = vector.broadcast %22 : vector<1x128xf32> to vector<16x128xf32>
      %c0_14 = arith.constant 0 : index
      %c0_15 = arith.constant 0 : index
      %24 = vector.load %arg9[%c0_14, %c0_15] : memref<16x128xbf16, #tpu.memory_space<vmem>>, vector<16x128xbf16>
      %c0_16 = arith.constant 0 : index
      %c0_17 = arith.constant 0 : index
      %25 = vector.load %arg10[%c0_16, %c0_17] : memref<16x128xf32, #tpu.memory_space<vmem>>, vector<16x128xf32>
      %c0_18 = arith.constant 0 : index
      %c0_19 = arith.constant 0 : index
      %26 = vector.load %arg11[%c0_18, %c0_19] : memref<16x128xf32, #tpu.memory_space<vmem>>, vector<16x128xf32>
      %c0_i32_20 = arith.constant 0 : i32
      %27 = arith.subi %6, %c0_i32_20 : i32
      %28 = arith.addi %c0_i32_20, %27 : i32
      %c1_i32 = arith.constant 1 : i32
      %29:3 = scf.for %arg12 = %c0_i32_20 to %28 step %c1_i32 iter_args(%arg13 = %24, %arg14 = %25, %arg15 = %26) -> (vector<16x128xbf16>, vector<16x128xf32>, vector<16x128xf32>)  : i32 {
        %33 = arith.index_cast %arg12 : i32 to index
        %c0_27 = arith.constant 0 : index
        %c0_28 = arith.constant 0 : index
        %34 = vector.load %arg3[%33, %c0_27, %c0_28] : memref<8x16x512xbf16, #tpu.memory_space<vmem>>, vector<1x16x512xbf16>
        %35 = vector.shape_cast %34 : vector<1x16x512xbf16> to vector<16x512xbf16>
        %36 = arith.extf %35 : vector<16x512xbf16> to vector<16x512xf32>
        %cst = arith.constant dense<0.000000e+00> : vector<16x512xf32>
        %37 = tpu.matmul %arg13, %17, %cst {dimension_numbers = #tpu.dot_dimension_numbers<[1], [0], [0], [1], [0, 0, 1, 1], [], []>} : vector<16x128xbf16>, vector<128x512xbf16>, vector<16x512xf32> -> vector<16x512xf32>
        %38 = arith.addf %37, %36 : vector<16x512xf32>
        %39 = arith.addf %38, %20 : vector<16x512xf32>
        %40 = vector.extract_strided_slice %39 {offsets = [0, 0], sizes = [16, 128], strides = [1, 1]} : vector<16x512xf32> to vector<16x128xf32>
        %41 = arith.negf %40 : vector<16x128xf32>
        %42 = math.exp %41 : vector<16x128xf32>
        %cst_29 = arith.constant 1.000000e+00 : f32
        %43 = vector.broadcast %cst_29 : f32 to vector<16x128xf32>
        %44 = arith.addf %43, %42 : vector<16x128xf32>
        %45 = arith.divf %43, %44 : vector<16x128xf32>
        %46 = vector.extract_strided_slice %39 {offsets = [0, 128], sizes = [16, 128], strides = [1, 1]} : vector<16x512xf32> to vector<16x128xf32>
        %47 = arith.negf %46 : vector<16x128xf32>
        %48 = math.exp %47 : vector<16x128xf32>
        %cst_30 = arith.constant 1.000000e+00 : f32
        %49 = vector.broadcast %cst_30 : f32 to vector<16x128xf32>
        %50 = arith.addf %49, %48 : vector<16x128xf32>
        %51 = arith.divf %49, %50 : vector<16x128xf32>
        %52 = vector.extract_strided_slice %39 {offsets = [0, 256], sizes = [16, 128], strides = [1, 1]} : vector<16x512xf32> to vector<16x128xf32>
        %53 = math.tanh %52 : vector<16x128xf32>
        %54 = vector.extract_strided_slice %39 {offsets = [0, 384], sizes = [16, 128], strides = [1, 1]} : vector<16x512xf32> to vector<16x128xf32>
        %55 = arith.negf %54 : vector<16x128xf32>
        %56 = math.exp %55 : vector<16x128xf32>
        %cst_31 = arith.constant 1.000000e+00 : f32
        %57 = vector.broadcast %cst_31 : f32 to vector<16x128xf32>
        %58 = arith.addf %57, %56 : vector<16x128xf32>
        %59 = arith.divf %57, %58 : vector<16x128xf32>
        %60 = arith.mulf %51, %arg14 : vector<16x128xf32>
        %61 = arith.mulf %45, %53 : vector<16x128xf32>
        %62 = arith.addf %60, %61 : vector<16x128xf32>
        %63 = math.tanh %62 : vector<16x128xf32>
        %64 = arith.mulf %59, %63 : vector<16x128xf32>
        %65 = arith.mulf %64, %23 : vector<16x128xf32>
        %cst_32 = arith.constant dense<0.000000e+00> : vector<16xf32>
        %66 = vector.multi_reduction <add>, %65, %cst_32 [1] : vector<16x128xf32> to vector<16xf32>
        %67 = vector.shape_cast %66 : vector<16xf32> to vector<16x1xf32>
        %68 = arith.negf %67 : vector<16x1xf32>
        %69 = math.exp %68 : vector<16x1xf32>
        %cst_33 = arith.constant 1.000000e+00 : f32
        %70 = vector.broadcast %cst_33 : f32 to vector<16x1xf32>
        %71 = arith.addf %70, %69 : vector<16x1xf32>
        %72 = arith.divf %70, %71 : vector<16x1xf32>
        %73 = arith.addi %3, %arg12 : i32
        %74 = vector.broadcast %73 : i32 to vector<16x1xi32>
        %75 = arith.cmpi sgt, %16, %74 : vector<16x1xi32>
        %76 = arith.extui %75 : vector<16x1xi1> to vector<16x1xi32>
        %77 = arith.sitofp %76 : vector<16x1xi32> to vector<16x1xf32>
        %78 = arith.truncf %64 : vector<16x128xf32> to vector<16x128xbf16>
        %79 = arith.mulf %77, %72 : vector<16x1xf32>
        %80 = vector.broadcast %79 : vector<16x1xf32> to vector<16x128xf32>
        %81 = arith.mulf %80, %64 : vector<16x128xf32>
        %82 = arith.addf %arg15, %81 : vector<16x128xf32>
        scf.yield %78, %62, %82 : vector<16x128xbf16>, vector<16x128xf32>, vector<16x128xf32>
      }
      %c0_21 = arith.constant 0 : index
      %c0_22 = arith.constant 0 : index
      %30 = vector.load %arg9[%c0_21, %c0_22] : memref<16x128xbf16, #tpu.memory_space<vmem>>, vector<16x128xbf16>
      tpu.vector_store %arg9[%c0_21, %c0_22], %29#0 {strides = array<i32>} : memref<16x128xbf16, #tpu.memory_space<vmem>>, vector<16x128xbf16>,
      %c0_23 = arith.constant 0 : index
      %c0_24 = arith.constant 0 : index
      %31 = vector.load %arg10[%c0_23, %c0_24] : memref<16x128xf32, #tpu.memory_space<vmem>>, vector<16x128xf32>
      tpu.vector_store %arg10[%c0_23, %c0_24], %29#1 {strides = array<i32>} : memref<16x128xf32, #tpu.memory_space<vmem>>, vector<16x128xf32>,
      %c0_25 = arith.constant 0 : index
      %c0_26 = arith.constant 0 : index
      %32 = vector.load %arg11[%c0_25, %c0_26] : memref<16x128xf32, #tpu.memory_space<vmem>>, vector<16x128xf32>
      tpu.vector_store %arg11[%c0_25, %c0_26], %29#2 {strides = array<i32>} : memref<16x128xf32, #tpu.memory_space<vmem>>, vector<16x128xf32>,
    } else {
    }
    %c0_i32_5 = arith.constant 0 : i32
    %13 = arith.cmpi eq, %arg1, %c0_i32_5 : i32
    %14 = arith.extui %13 : i1 to i32
    %c0_i32_6 = arith.constant 0 : i32
    %15 = arith.cmpi ne, %14, %c0_i32_6 : i32
    scf.if %15 {
      %c0 = arith.constant 0 : index
      %c0_7 = arith.constant 0 : index
      %16 = vector.load %arg11[%c0, %c0_7] : memref<16x128xf32, #tpu.memory_space<vmem>>, vector<16x128xf32>
      %c0_8 = arith.constant 0 : index
      %c0_9 = arith.constant 0 : index
      %17 = vector.load %arg8[%c0_8, %c0_9] : memref<16x128xf32, #tpu.memory_space<vmem>>, vector<16x128xf32>
      tpu.vector_store %arg8[%c0_8, %c0_9], %16 {strides = array<i32>} : memref<16x128xf32, #tpu.memory_space<vmem>>, vector<16x128xf32>,
    } else {
    }
    return
  }
  func.func @transform_0(%arg0: i32, %arg1: i32, %arg2: memref<16xi32, #tpu.memory_space<smem>>) -> (i32, i32, i32) {
    %c16_i32 = arith.constant 16 : i32
    %0 = arith.muli %arg0, %c16_i32 : i32
    %1 = arith.index_cast %0 : i32 to index
    %2 = memref.load %arg2[%1] : memref<16xi32, #tpu.memory_space<smem>>
    %c7_i32 = arith.constant 7 : i32
    %3 = arith.addi %2, %c7_i32 : i32
    %c8_i32 = arith.constant 8 : i32
    %4 = arith.divsi %3, %c8_i32 : i32
    %c1_i32 = arith.constant 1 : i32
    %5 = arith.subi %4, %c1_i32 : i32
    %c0_i32 = arith.constant 0 : i32
    %6 = arith.maxsi %5, %c0_i32 : i32
    %7 = arith.minsi %arg1, %6 : i32
    %c0_i32_0 = arith.constant 0 : i32
    %c0_i32_1 = arith.constant 0 : i32
    return %7, %arg0, %c0_i32_0 : i32, i32, i32
  }
  func.func @transform_1(%arg0: i32, %arg1: i32, %arg2: memref<16xi32, #tpu.memory_space<smem>>) -> (i32, i32) {
    %c0_i32 = arith.constant 0 : i32
    %c0_i32_0 = arith.constant 0 : i32
    return %arg0, %c0_i32 : i32, i32
  }
  func.func @transform_2(%arg0: i32, %arg1: i32, %arg2: memref<16xi32, #tpu.memory_space<smem>>) -> (i32, i32) {
    %c0_i32 = arith.constant 0 : i32
    %c0_i32_0 = arith.constant 0 : i32
    %c0_i32_1 = arith.constant 0 : i32
    return %c0_i32, %c0_i32_0 : i32, i32
  }
  func.func @transform_3(%arg0: i32, %arg1: i32, %arg2: memref<16xi32, #tpu.memory_space<smem>>) -> (i32, i32) {
    %c0_i32 = arith.constant 0 : i32
    %c0_i32_0 = arith.constant 0 : i32
    %c0_i32_1 = arith.constant 0 : i32
    return %c0_i32, %c0_i32_0 : i32, i32
  }
  func.func @transform_4(%arg0: i32, %arg1: i32, %arg2: memref<16xi32, #tpu.memory_space<smem>>) -> (i32, i32) {
    %c0_i32 = arith.constant 0 : i32
    %c0_i32_0 = arith.constant 0 : i32
    %c0_i32_1 = arith.constant 0 : i32
    return %c0_i32, %c0_i32_0 : i32, i32
  }
  func.func @transform_5(%arg0: i32, %arg1: i32, %arg2: memref<16xi32, #tpu.memory_space<smem>>) -> (i32, i32) {
    %c0_i32 = arith.constant 0 : i32
    %c0_i32_0 = arith.constant 0 : i32
    return %arg0, %c0_i32 : i32, i32
  }
}

</mosaic_0001>

<llo_original>
// kernel: tpu_custom_call.1
$region0: #{tpu_custom_call.1}
  #allocation0 [shape = 'u32[]', space=smem, size = 0x4, offset = 0x4, fixed_abs, tag = 'smem constant byte address 0x4 - core index']
  #allocation1 [shape = 'u32[144,128]{1,0:T(1,128)}', space=vmem, size = 0x12000, scoped, tag = 'internal scratch']
  #allocation2 [shape = 'bf16[16,128]{1,0:T(16,128)(2,1)}', space=vmem, size = 0x1000, scoped, tag = 'scratch operand']
  #allocation3 [shape = 'f32[16,128]{1,0:T(8,128)}', space=vmem, size = 0x2000, scoped, tag = 'scratch operand']
  #allocation4 [shape = 'f32[16,128]{1,0:T(8,128)}', space=vmem, size = 0x2000, scoped, tag = 'scratch operand']
  #allocation5 [shape = 's32[1]{0}', space=sflag, size = 0x4, scoped, tag = 'scoped memory for tpu_custom_call.1']
  #allocation6 [shape = 'u8[512]{0}', space=smem, size = 0x200, scoped, tag = 'prefetched SMEM operand 0']
  %s0 = inlined_call_operand.vmem [shape: s32[16], index: 0, kind: input, shape index: {}]
  %s1 = inlined_call_operand.hbm [shape: bf16[8,16,512], index: 1, kind: input, shape index: {}]
  %s2 = inlined_call_operand.vmem [shape: s32[16,1], index: 2, kind: input, shape index: {}]
  %s3 = inlined_call_operand.hbm [shape: bf16[128,512], index: 3, kind: input, shape index: {}]
  %s4 = inlined_call_operand.vmem [shape: f32[1,512], index: 4, kind: input, shape index: {}]
  %s5 = inlined_call_operand.vmem [shape: f32[1,128], index: 5, kind: input, shape index: {}]
  %s6 = inlined_call_operand.hbm [shape: f32[16,128], index: 6, kind: output, shape index: {}]
  %s7 = sld [smem:[#allocation0]]
  $region57: #{tpu_custom_call.1} parent=0
    _
  %s9 = ssub.s32 1, %s7
  %s10 = scalar_select 0, %s9, %s7
  %s11 = sshll.u32 %s0, 4
  %s12 = int_to_ptr.vmem [resolvable:$true] %s11
  %14 = dma.vmem_to_smem %s12, 16, [#allocation6], [#allocation5]
  %15 = dma.done [#allocation5], 16
  %16 = sfence
  $region1: #{tpu_custom_call.1} parent=0
    #allocation7 [shape = 'u8[131072]{0}', space=vmem, size = 0x20000, scoped, tag = 'input window, operand 1, single buffered']
    #allocation8 [shape = 's32[1]{0}', space=sflag, size = 0x4, scoped, tag = 'scoped memory for tpu_custom_call.1']
    #allocation9 [shape = 's32[1]{0}', space=sflag, size = 0x4, scoped, tag = 'scoped memory for tpu_custom_call.1']
    #allocation10 [shape = 'u8[131072]{0}', space=vmem, size = 0x20000, scoped, tag = 'input window, operand 3, single buffered']
    #allocation11 [shape = 's32[1]{0}', space=sflag, size = 0x4, scoped, tag = 'scoped memory for tpu_custom_call.1']
    #allocation12 [shape = 'u8[8192]{0}', space=vmem, size = 0x2000, scoped, tag = 'output window, operand 0, single buffered']
    %17 = vsyncpa [#allocation8], 0
    %18 = vsyncpa [#allocation11], 0
    %19 = vsyncpa [#allocation9], 0
    // Predicated region
    $region2: #{tpu_custom_call.1} parent=1 // pred_check
      _
    $region3: #{tpu_custom_call.1} parent=1 // pred_check_branch
      %21 = sbr.rel (0) target = $region5
    $region4: #{tpu_custom_call.1} parent=1 // pred_region
      %s22 = smul.u32 0, 16
      %s23 = sld [smem:[#allocation6 + %s22]]
      %s24 = sadd.s32 %s23, 7
      %p25 = scmp.lt.s32.totalorder %s24, 0
      %s26 = ssub.s32 0, %s24
      %s27 = scalar_select %p25, %s26, %s24
      %s28 = sshrl.u32 %s27, 3
      %s29 = ssub.s32 0, %s28
      %s30 = scalar_select %p25, %s29, %s28
      %s31 = ssub.s32 %s30, 1
      %p32 = scmp.gt.s32.totalorder %s31, 0
      %s33 = scalar_select %p32, %s31, 0
      %p34 = scmp.lt.s32.totalorder 0, %s33
      %s35 = scalar_select %p34, 0, %s33
      %s36 = smul.u32 8, %s35
      %s38 = ssub.s32 4096, 4096
      %39 = vsyncadd [#allocation8], %s38
      %s40 = smul.addr %s36, 8
      %s41 = smul.addr %s40, 64
      %s42 = scalar_lea.hbm %s1, %s41
      %s43 = sshll.u32 [#allocation7], 4
      %s44 = int_to_ptr.vmem [resolvable:$true] %s43
      %49 = dma.hbm_to_vmem [thread:$0]  %s42, 4096, %s44, [#allocation8], 256, 256, 16
    $region5: #{tpu_custom_call.1} parent=1 // pred_fallthru
      _
    // Predicated region
    $region6: #{tpu_custom_call.1} parent=1 // pred_check
      _
    $region7: #{tpu_custom_call.1} parent=1 // pred_check_branch
      %51 = sbr.rel (0) target = $region9
    $region8: #{tpu_custom_call.1} parent=1 // pred_region
      _
    $region9: #{tpu_custom_call.1} parent=1 // pred_fallthru
      _
    // Predicated region
    $region10: #{tpu_custom_call.1} parent=1 // pred_check
      _
    $region11: #{tpu_custom_call.1} parent=1 // pred_check_branch
      %53 = sbr.rel (0) target = $region13
    $region12: #{tpu_custom_call.1} parent=1 // pred_region
      %s55 = ssub.s32 4096, 4096
      %56 = vsyncadd [#allocation11], %s55
      %s57 = sshll.u32 [#allocation10], 4
      %s58 = int_to_ptr.vmem [resolvable:$true] %s57
      %63 = dma.hbm_to_vmem [thread:$0]  %s3, 4096, %s58, [#allocation11], 256, 256, 16
    $region13: #{tpu_custom_call.1} parent=1 // pred_fallthru
      _
    // Predicated region
    $region14: #{tpu_custom_call.1} parent=1 // pred_check
      _
    $region15: #{tpu_custom_call.1} parent=1 // pred_check_branch
      %65 = sbr.rel (0) target = $region17
    $region16: #{tpu_custom_call.1} parent=1 // pred_region
      _
    $region17: #{tpu_custom_call.1} parent=1 // pred_fallthru
      _
    // Predicated region
    $region18: #{tpu_custom_call.1} parent=1 // pred_check
      _
    $region19: #{tpu_custom_call.1} parent=1 // pred_check_branch
      %67 = sbr.rel (0) target = $region21
    $region20: #{tpu_custom_call.1} parent=1 // pred_region
      _
    $region21: #{tpu_custom_call.1} parent=1 // pred_fallthru
      _
    // Predicated region
    $region22: #{tpu_custom_call.1} parent=1 // pred_check
      _
    $region23: #{tpu_custom_call.1} parent=1 // pred_check_branch
      %69 = sbr.rel (0) target = $region25
    $region24: #{tpu_custom_call.1} parent=1 // pred_region
      %70 = dma.done [#allocation8], 4096
    $region25: #{tpu_custom_call.1} parent=1 // pred_fallthru
      _
    // Predicated region
    $region26: #{tpu_custom_call.1} parent=1 // pred_check
      _
    $region27: #{tpu_custom_call.1} parent=1 // pred_check_branch
      %72 = sbr.rel (0) target = $region29
    $region28: #{tpu_custom_call.1} parent=1 // pred_region
      %73 = dma.done [#allocation11], 4096
    $region29: #{tpu_custom_call.1} parent=1 // pred_fallthru
      _
    %s74 = smul.u32 0, 16
    %s75 = sld [smem:[#allocation6 + %s74]]
    %s76 = sadd.s32 %s75, 7
    %p77 = scmp.lt.s32.totalorder %s76, 0
    %s78 = ssub.s32 0, %s76
    %s79 = scalar_select %p77, %s78, %s76
    %s80 = sshrl.u32 %s79, 3
    %s81 = ssub.s32 0, %s80
    %s82 = scalar_select %p77, %s81, %s80
    %s83 = ssub.s32 %s82, 1
    %p84 = scmp.gt.s32.totalorder %s83, 0
    %s85 = scalar_select %p84, %s83, 0
    %p86 = scmp.lt.s32.totalorder 0, %s85
    %s87 = scalar_select %p86, 0, %s85
    %s88 = smul.u32 8, %s87
    %s90 = smul.u32 0, 16
    %s91 = sld [smem:[#allocation6 + %s90]]
    %s92 = smul.u32 0, 8
    %s93 = ssub.s32 %s91, %s92
    %p94 = scmp.gt.s32.totalorder %s93, 0
    %s95 = scalar_select %p94, %s93, 0
    %p96 = scmp.lt.s32.totalorder %s95, 8
    %s97 = scalar_select %p96, %s95, 8
    %p98 = scmp.eq.s32.totalorder 0, 0
    // Predicated region
    $region30: #{tpu_custom_call.1} parent=1 // pred_check
      %p99 = pneg %p98
    $region31: #{tpu_custom_call.1} parent=1 // pred_check_branch
      %101 = sbr.rel (%p99) target = $region33
    $region32: #{tpu_custom_call.1} parent=1 // pred_region
      %102 = vst [vmem:[#allocation2] sm:$0xff] 0
      %103 = vst [vmem:[#allocation3] sm:$0xff] 0.0
      %104 = vst [vmem:[#allocation3 + $0x8] sm:$0xff] 0.0
      %105 = vst [vmem:[#allocation4] sm:$0xff] 0.0
      %106 = vst [vmem:[#allocation4 + $0x8] sm:$0xff] 0.0
    $region33: #{tpu_custom_call.1} parent=1 // pred_fallthru
      _
    %p107 = scmp.gt.s32.totalorder %s97, 0
    // Predicated region
    $region34: #{tpu_custom_call.1} parent=1 // pred_check
      %p108 = pneg %p107
    $region35: #{tpu_custom_call.1} parent=1 // pred_check_branch
      %110 = sbr.rel (%p108) target = $region37
    $region36: #{tpu_custom_call.1} parent=1 // pred_region
      %v111 = vld [vmem:[%s2] sm:$0xff]
      %v112 = vld [vmem:[%s2 + $0x8] sm:$0xff]
      %v113 = vld [vmem:[#allocation10] sm:$0xff]
      %v114 = vld [vmem:[#allocation10 + $0x8] sm:$0xff]
      %v115 = vld [vmem:[#allocation10 + $0x10] sm:$0xff]
      %v116 = vld [vmem:[#allocation10 + $0x18] sm:$0xff]
      %v117 = vld [vmem:[#allocation10 + $0x20] sm:$0xff]
      %v118 = vld [vmem:[#allocation10 + $0x28] sm:$0xff]
      %v119 = vld [vmem:[#allocation10 + $0x30] sm:$0xff]
      %v120 = vld [vmem:[#allocation10 + $0x38] sm:$0xff]
      %v121 = vld [vmem:[#allocation10 + $0x40] sm:$0xff]
      %v122 = vld [vmem:[#allocation10 + $0x48] sm:$0xff]
      %v123 = vld [vmem:[#allocation10 + $0x50] sm:$0xff]
      %v124 = vld [vmem:[#allocation10 + $0x58] sm:$0xff]
      %v125 = vld [vmem:[#allocation10 + $0x60] sm:$0xff]
      %v126 = vld [vmem:[#allocation10 + $0x68] sm:$0xff]
      %v127 = vld [vmem:[#allocation10 + $0x70] sm:$0xff]
      %v128 = vld [vmem:[#allocation10 + $0x78] sm:$0xff]
      %v129 = vld [vmem:[#allocation10 + $0x80] sm:$0xff]
      %v130 = vld [vmem:[#allocation10 + $0x88] sm:$0xff]
      %v131 = vld [vmem:[#allocation10 + $0x90] sm:$0xff]
      %v132 = vld [vmem:[#allocation10 + $0x98] sm:$0xff]
      %v133 = vld [vmem:[#allocation10 + $0xa0] sm:$0xff]
      %v134 = vld [vmem:[#allocation10 + $0xa8] sm:$0xff]
      %v135 = vld [vmem:[#allocation10 + $0xb0] sm:$0xff]
      %v136 = vld [vmem:[#allocation10 + $0xb8] sm:$0xff]
      %v137 = vld [vmem:[#allocation10 + $0xc0] sm:$0xff]
      %v138 = vld [vmem:[#allocation10 + $0xc8] sm:$0xff]
      %v139 = vld [vmem:[#allocation10 + $0xd0] sm:$0xff]
      %v140 = vld [vmem:[#allocation10 + $0xd8] sm:$0xff]
      %v141 = vld [vmem:[#allocation10 + $0xe0] sm:$0xff]
      %v142 = vld [vmem:[#allocation10 + $0xe8] sm:$0xff]
      %v143 = vld [vmem:[#allocation10 + $0xf0] sm:$0xff]
      %v144 = vld [vmem:[#allocation10 + $0xf8] sm:$0xff]
      %v145 = vld [vmem:[%s4] sm:$0xf]
      %v147 = vlaneseq
      %v148 = vshrl.u32 %v147, 7
      %v149 = vsub.s32 0, %v148
      %v150 = vrot.slane %v145, %v149
      %v151 = vlaneseq
      %v152 = vshrl.u32 %v151, 7
      %v153 = vsub.s32 1, %v152
      %v154 = vrot.slane %v145, %v153
      %v155 = vlaneseq
      %v156 = vshrl.u32 %v155, 7
      %v157 = vsub.s32 2, %v156
      %v158 = vrot.slane %v145, %v157
      %v159 = vlaneseq
      %v160 = vshrl.u32 %v159, 7
      %v161 = vsub.s32 3, %v160
      %v162 = vrot.slane %v145, %v161
      %v167 = vld [vmem:[%s5] sm:$0x1]
      %v169 = vlaneseq
      %v170 = vshrl.u32 %v169, 7
      %v171 = vsub.s32 0, %v170
      %v172 = vrot.slane %v167, %v171
      %v174 = vld [vmem:[#allocation2] sm:$0xff]
      %v175 = vld [vmem:[#allocation3] sm:$0xff]
      %v176 = vld [vmem:[#allocation3 + $0x8] sm:$0xff]
      %v177 = vld [vmem:[#allocation4] sm:$0xff]
      %v178 = vld [vmem:[#allocation4 + $0x8] sm:$0xff]
      // While loop
      $region38: #{tpu_custom_call.1} parent=36 // loop_pre_header
        _
      $region39: #{tpu_custom_call.1} parent=36 // loop_header
        %s180 = sphi 0, %s182
        %p181 = scmp.ge.s32.totalorder %s180, %s97
        %v185 = vphi %v174, %v533
        %v186 = vphi %v175, %v501
        %v187 = vphi %v176, %v502
        %v188 = vphi %v177, %v548
        %v189 = vphi %v178, %v549
      $region40: #{tpu_custom_call.1} parent=36 // loop_header_branch
        %184 = sbr.rel (%p181) target = $region44
      $region41: #{tpu_custom_call.1} parent=36 // loop_body
        %s190 = smul.u32 %s180, 8
        %s191 = smul.addr %s190, 4
        %s192 = scalar_lea.vmem [#allocation7], %s191
        %v193 = vld [vmem:[%s192] sm:$0xff]
        %v194 = vld [vmem:[%s192 + $0x8] sm:$0xff]
        %v195 = vld [vmem:[%s192 + $0x10] sm:$0xff]
        %v196 = vld [vmem:[%s192 + $0x18] sm:$0xff]
        %v197 = vunpack.c.l.bf16 %v193
        %v198 = vunpack.c.h.bf16 %v193
        %v199 = vunpack.c.l.bf16 %v194
        %v200 = vunpack.c.h.bf16 %v194
        %v201 = vunpack.c.l.bf16 %v195
        %v202 = vunpack.c.h.bf16 %v195
        %v203 = vunpack.c.l.bf16 %v196
        %v204 = vunpack.c.h.bf16 %v196
        %v237 = vunpack.c.l.b16 %v113
        %v238 = vunpack.c.h.b16 %v113
        %v239 = vunpack.c.l.b16 %v114
        %v240 = vunpack.c.h.b16 %v114
        %v241 = vunpack.c.l.b16 %v115
        %v242 = vunpack.c.h.b16 %v115
        %v243 = vunpack.c.l.b16 %v116
        %v244 = vunpack.c.h.b16 %v116
        %v245 = vunpack.c.l.b16 %v117
        %v246 = vunpack.c.h.b16 %v117
        %v247 = vunpack.c.l.b16 %v118
        %v248 = vunpack.c.h.b16 %v118
        %v249 = vunpack.c.l.b16 %v119
        %v250 = vunpack.c.h.b16 %v119
        %v251 = vunpack.c.l.b16 %v120
        %v252 = vunpack.c.h.b16 %v120
        %v253 = vunpack.c.l.b16 %v121
        %v254 = vunpack.c.h.b16 %v121
        %v255 = vunpack.c.l.b16 %v122
        %v256 = vunpack.c.h.b16 %v122
        %v257 = vunpack.c.l.b16 %v123
        %v258 = vunpack.c.h.b16 %v123
        %v259 = vunpack.c.l.b16 %v124
        %v260 = vunpack.c.h.b16 %v124
        %v261 = vunpack.c.l.b16 %v125
        %v262 = vunpack.c.h.b16 %v125
        %v263 = vunpack.c.l.b16 %v126
        %v264 = vunpack.c.h.b16 %v126
        %v265 = vunpack.c.l.b16 %v127
        %v266 = vunpack.c.h.b16 %v127
        %v267 = vunpack.c.l.b16 %v128
        %v268 = vunpack.c.h.b16 %v128
        %v269 = vunpack.c.l.b16 %v129
        %v270 = vunpack.c.h.b16 %v129
        %v271 = vunpack.c.l.b16 %v130
        %v272 = vunpack.c.h.b16 %v130
        %v273 = vunpack.c.l.b16 %v131
        %v274 = vunpack.c.h.b16 %v131
        %v275 = vunpack.c.l.b16 %v132
        %v276 = vunpack.c.h.b16 %v132
        %v277 = vunpack.c.l.b16 %v133
        %v278 = vunpack.c.h.b16 %v133
        %v279 = vunpack.c.l.b16 %v134
        %v280 = vunpack.c.h.b16 %v134
        %v281 = vunpack.c.l.b16 %v135
        %v282 = vunpack.c.h.b16 %v135
        %v283 = vunpack.c.l.b16 %v136
        %v284 = vunpack.c.h.b16 %v136
        %v285 = vunpack.c.l.b16 %v137
        %v286 = vunpack.c.h.b16 %v137
        %v287 = vunpack.c.l.b16 %v138
        %v288 = vunpack.c.h.b16 %v138
        %v289 = vunpack.c.l.b16 %v139
        %v290 = vunpack.c.h.b16 %v139
        %v291 = vunpack.c.l.b16 %v140
        %v292 = vunpack.c.h.b16 %v140
        %v293 = vunpack.c.l.b16 %v141
        %v294 = vunpack.c.h.b16 %v141
        %v295 = vunpack.c.l.b16 %v142
        %v296 = vunpack.c.h.b16 %v142
        %v297 = vunpack.c.l.b16 %v143
        %v298 = vunpack.c.h.b16 %v143
        %v299 = vunpack.c.l.b16 %v144
        %v300 = vunpack.c.h.b16 %v144
        %v301 = vpack.c.b16 %v241, %v237
        %v302 = vpack.c.b16 %v242, %v238
        %v303 = vpack.c.b16 %v243, %v239
        %v304 = vpack.c.b16 %v244, %v240
        %v305 = vpack.c.b16 %v249, %v245
        %v306 = vpack.c.b16 %v250, %v246
        %v307 = vpack.c.b16 %v251, %v247
        %v308 = vpack.c.b16 %v252, %v248
        %v309 = vpack.c.b16 %v257, %v253
        %v310 = vpack.c.b16 %v258, %v254
        %v311 = vpack.c.b16 %v259, %v255
        %v312 = vpack.c.b16 %v260, %v256
        %v313 = vpack.c.b16 %v265, %v261
        %v314 = vpack.c.b16 %v266, %v262
        %v315 = vpack.c.b16 %v267, %v263
        %v316 = vpack.c.b16 %v268, %v264
        %v317 = vpack.c.b16 %v273, %v269
        %v318 = vpack.c.b16 %v274, %v270
        %v319 = vpack.c.b16 %v275, %v271
        %v320 = vpack.c.b16 %v276, %v272
        %v321 = vpack.c.b16 %v281, %v277
        %v322 = vpack.c.b16 %v282, %v278
        %v323 = vpack.c.b16 %v283, %v279
        %v324 = vpack.c.b16 %v284, %v280
        %v325 = vpack.c.b16 %v289, %v285
        %v326 = vpack.c.b16 %v290, %v286
        %v327 = vpack.c.b16 %v291, %v287
        %v328 = vpack.c.b16 %v292, %v288
        %v329 = vpack.c.b16 %v297, %v293
        %v330 = vpack.c.b16 %v298, %v294
        %v331 = vpack.c.b16 %v299, %v295
        %v332 = vpack.c.b16 %v300, %v296
        %365 = vmatprep.subr.bf16.mxu0 %v302
        %366 = vmatpush1.bf16.msra.mxu0 %v301
        %367 = vmatprep.subr.bf16.mxu0 %v306
        %368 = vmatpush1.bf16.msra.mxu0 %v305
        %369 = vmatprep.subr.bf16.mxu0 %v310
        %370 = vmatpush1.bf16.msra.mxu0 %v309
        %371 = vmatprep.subr.bf16.mxu0 %v314
        %372 = vmatpush1.bf16.msra.mxu0 %v313
        %373 = vmatprep.subr.bf16.mxu0 %v318
        %374 = vmatpush1.bf16.msra.mxu0 %v317
        %375 = vmatprep.subr.bf16.mxu0 %v322
        %376 = vmatpush1.bf16.msra.mxu0 %v321
        %377 = vmatprep.subr.bf16.mxu0 %v326
        %378 = vmatpush1.bf16.msra.mxu0 %v325
        %379 = vmatprep.subr.bf16.mxu0 %v330
        %380 = vmatpush1.bf16.msra.mxu0 %v329
        %381 = vmatprep.subr.bf16.mxu0 0
        %382 = vmatpush1.bf16.msra.mxu0 0
        %383 = vmatprep.subr.bf16.mxu0 0
        %384 = vmatpush1.bf16.msra.mxu0 0
        %385 = vmatprep.subr.bf16.mxu0 0
        %386 = vmatpush1.bf16.msra.mxu0 0
        %387 = vmatprep.subr.bf16.mxu0 0
        %388 = vmatpush1.bf16.msra.mxu0 0
        %389 = vmatprep.subr.bf16.mxu0 0
        %390 = vmatpush1.bf16.msra.mxu0 0
        %391 = vmatprep.subr.bf16.mxu0 0
        %392 = vmatpush1.bf16.msra.mxu0 0
        %393 = vmatprep.subr.bf16.mxu0 0
        %394 = vmatpush1.bf16.msra.mxu0 0
        %395 = vmatprep.subr.bf16.mxu0 0
        %396 = vmatpush1.bf16.msra.mxu0 0
        %397 = vmatprep.mubr.bf16.mxu0 0
        %398 = vmatmul.mubr.bf16.gmra.mrb[0].mxu0 %v185
        %v399 = vpop.f32.mrb[0].mxu0
        %v400 = vadd.f32 %v197, %v399
        %v401 = vpop.f32.mrb[0].mxu0
        %v402 = vadd.f32 %v198, %v401
        %v403 = vpop.f32.mrb[0].mxu0
        %v404 = vadd.f32 %v201, %v403
        %v405 = vpop.f32.mrb[0].mxu0
        %v406 = vadd.f32 %v202, %v405
        %407 = vdwg.mxu0
        %408 = vmatprep.subr.bf16.mxu0 %v304
        %409 = vmatpush1.bf16.msra.mxu0 %v303
        %410 = vmatprep.subr.bf16.mxu0 %v308
        %411 = vmatpush1.bf16.msra.mxu0 %v307
        %412 = vmatprep.subr.bf16.mxu0 %v312
        %413 = vmatpush1.bf16.msra.mxu0 %v311
        %414 = vmatprep.subr.bf16.mxu0 %v316
        %415 = vmatpush1.bf16.msra.mxu0 %v315
        %416 = vmatprep.subr.bf16.mxu0 %v320
        %417 = vmatpush1.bf16.msra.mxu0 %v319
        %418 = vmatprep.subr.bf16.mxu0 %v324
        %419 = vmatpush1.bf16.msra.mxu0 %v323
        %420 = vmatprep.subr.bf16.mxu0 %v328
        %421 = vmatpush1.bf16.msra.mxu0 %v327
        %422 = vmatprep.subr.bf16.mxu0 %v332
        %423 = vmatpush1.bf16.msra.mxu0 %v331
        %424 = vmatprep.subr.bf16.mxu0 0
        %425 = vmatpush1.bf16.msra.mxu0 0
        %426 = vmatprep.subr.bf16.mxu0 0
        %427 = vmatpush1.bf16.msra.mxu0 0
        %428 = vmatprep.subr.bf16.mxu0 0
        %429 = vmatpush1.bf16.msra.mxu0 0
        %430 = vmatprep.subr.bf16.mxu0 0
        %431 = vmatpush1.bf16.msra.mxu0 0
        %432 = vmatprep.subr.bf16.mxu0 0
        %433 = vmatpush1.bf16.msra.mxu0 0
        %434 = vmatprep.subr.bf16.mxu0 0
        %435 = vmatpush1.bf16.msra.mxu0 0
        %436 = vmatprep.subr.bf16.mxu0 0
        %437 = vmatpush1.bf16.msra.mxu0 0
        %438 = vmatprep.subr.bf16.mxu0 0
        %439 = vmatpush1.bf16.msra.mxu0 0
        %440 = vmatprep.mubr.bf16.mxu0 0
        %441 = vmatmul.mubr.bf16.gmra.mrb[0].mxu0 %v185
        %v442 = vpop.f32.mrb[0].mxu0
        %v443 = vadd.f32 %v199, %v442
        %v444 = vpop.f32.mrb[0].mxu0
        %v445 = vadd.f32 %v200, %v444
        %v446 = vpop.f32.mrb[0].mxu0
        %v447 = vadd.f32 %v203, %v446
        %v448 = vpop.f32.mrb[0].mxu0
        %v449 = vadd.f32 %v204, %v448
        %450 = vdwg.mxu0
        %v451 = vadd.f32 %v400, %v150
        %v452 = vadd.f32 %v402, %v154
        %v453 = vadd.f32 %v443, %v158
        %v454 = vadd.f32 %v445, %v162
        %v455 = vadd.f32 %v404, %v150
        %v456 = vadd.f32 %v406, %v154
        %v457 = vadd.f32 %v447, %v158
        %v458 = vadd.f32 %v449, %v162
        %v459 = vxor.u32 %v451, 2147483648
        %v460 = vxor.u32 %v455, 2147483648
        %v461 = vmul.f32 %v459, 1.442695
        %v462 = vpow.pop %v461
        %v463 = vmul.f32 %v460, 1.442695
        %v464 = vpow.pop %v463
        %v465 = vadd.f32 %v462, 1.0
        %v466 = vadd.f32 %v464, 1.0
        %v467 = vrcp.pop %v465
        %v468 = vmul.f32 1.0, %v467
        %v469 = vrcp.pop %v466
        %v470 = vmul.f32 1.0, %v469
        %v471 = vxor.u32 %v452, 2147483648
        %v472 = vxor.u32 %v456, 2147483648
        %v473 = vmul.f32 %v471, 1.442695
        %v474 = vpow.pop %v473
        %v475 = vmul.f32 %v472, 1.442695
        %v476 = vpow.pop %v475
        %v477 = vadd.f32 %v474, 1.0
        %v478 = vadd.f32 %v476, 1.0
        %v479 = vrcp.pop %v477
        %v480 = vmul.f32 1.0, %v479
        %v481 = vrcp.pop %v478
        %v482 = vmul.f32 1.0, %v481
        %v483 = vtanh.pop %v453
        %v484 = vtanh.pop %v457
        %v485 = vxor.u32 %v454, 2147483648
        %v486 = vxor.u32 %v458, 2147483648
        %v487 = vmul.f32 %v485, 1.442695
        %v488 = vpow.pop %v487
        %v489 = vmul.f32 %v486, 1.442695
        %v490 = vpow.pop %v489
        %v491 = vadd.f32 %v488, 1.0
        %v492 = vadd.f32 %v490, 1.0
        %v493 = vrcp.pop %v491
        %v494 = vmul.f32 1.0, %v493
        %v495 = vrcp.pop %v492
        %v496 = vmul.f32 1.0, %v495
        %v497 = vmul.f32 %v480, %v186
        %v498 = vmul.f32 %v482, %v187
        %v499 = vmul.f32 %v468, %v483
        %v500 = vmul.f32 %v470, %v484
        %v501 = vadd.f32 %v497, %v499
        %v502 = vadd.f32 %v498, %v500
        %v503 = vtanh.pop %v501
        %v504 = vtanh.pop %v502
        %v505 = vmul.f32 %v494, %v503
        %v506 = vmul.f32 %v496, %v504
        %v507 = vmul.f32 %v505, %v172
        %v508 = vmul.f32 %v506, %v172
        %509 = vadd.xlane.f32.xlu0 %v507
        %v510 = vpop.xlane.xlu0 %509
        %511 = vadd.xlane.f32.xlu0 %v508
        %v512 = vpop.xlane.xlu0 %511
        %v513 = vxor.u32 %v510, 2147483648
        %v514 = vxor.u32 %v512, 2147483648
        %v515 = vmul.f32 %v513, 1.442695
        %v516 = vpow.pop %v515
        %v517 = vmul.f32 %v514, 1.442695
        %v518 = vpow.pop %v517
        %v519 = vadd.f32 %v516, 1.0
        %v520 = vadd.f32 %v518, 1.0
        %v521 = vrcp.pop %v519
        %v522 = vmul.f32 1.0, %v521
        %v523 = vrcp.pop %v520
        %v524 = vmul.f32 1.0, %v523
        %s525 = sadd.s32 %s92, %s180
        %v526 = vstv %s525
        %vm527 = vcmp.gt.s32.totalorder %v111, %v526
        %vm528 = vcmp.gt.s32.totalorder %v112, %v526
        %v529 = vsel %vm527, 1, 0
        %v530 = vsel %vm528, 1, 0
        %v531 = vcvt.s32.f32 %v529
        %v532 = vcvt.s32.f32 %v530
        %v533 = vpack.c.bf16 %v506, %v505
        %v534 = vmul.f32 %v531, %v522
        %v535 = vmul.f32 %v532, %v524
        %537 = vset.pattern.permute.xlu0 0
        %538 = vperm.xlu0 %537, %v534
        %v539 = vpop.permute.xlu0 %538
        %542 = vset.pattern.permute.xlu0 0
        %543 = vperm.xlu0 %542, %v535
        %v544 = vpop.permute.xlu0 %543
        %v546 = vmul.f32 %v539, %v505
        %v547 = vmul.f32 %v544, %v506
        %v548 = vadd.f32 %v188, %v546
        %v549 = vadd.f32 %v189, %v547
      $region42: #{tpu_custom_call.1} parent=36 // loop_footer
        %s182 = sadd.s32 %s180, 1
      $region43: #{tpu_custom_call.1} parent=36 // loop_footer_branch
        %179 = sbr.rel target = $region39
      $region44: #{tpu_custom_call.1} parent=36 // loop_exit
        _
      %550 = vst [vmem:[#allocation2] sm:$0xff] %v185
      %551 = vst [vmem:[#allocation3] sm:$0xff] %v186
      %552 = vst [vmem:[#allocation3 + $0x8] sm:$0xff] %v187
      %553 = vst [vmem:[#allocation4] sm:$0xff] %v188
      %554 = vst [vmem:[#allocation4 + $0x8] sm:$0xff] %v189
    $region37: #{tpu_custom_call.1} parent=1 // pred_fallthru
      _
    // Predicated region
    $region45: #{tpu_custom_call.1} parent=1 // pred_check
      %p555 = pneg %p98
    $region46: #{tpu_custom_call.1} parent=1 // pred_check_branch
      %557 = sbr.rel (%p555) target = $region48
    $region47: #{tpu_custom_call.1} parent=1 // pred_region
      %v558 = vld [vmem:[#allocation4] sm:$0xff]
      %v559 = vld [vmem:[#allocation4 + $0x8] sm:$0xff]
      %560 = vst [vmem:[#allocation12] sm:$0xff] %v558
      %561 = vst [vmem:[#allocation12 + $0x8] sm:$0xff] %v559
    $region48: #{tpu_custom_call.1} parent=1 // pred_fallthru
      _
    // Predicated region
    $region49: #{tpu_custom_call.1} parent=1 // pred_check
      _
    $region50: #{tpu_custom_call.1} parent=1 // pred_check_branch
      %563 = sbr.rel (0) target = $region52
    $region51: #{tpu_custom_call.1} parent=1 // pred_region
      %s565 = ssub.s32 256, 256
      %566 = vsyncadd [#allocation9], %s565
      %s567 = sshll.u32 [#allocation12], 4
      %s568 = int_to_ptr.vmem [resolvable:$true] %s567
      %573 = dma.vmem_to_hbm [thread:$0]  %s568, 256, %s6, [#allocation9], 128, 128, 8
    $region52: #{tpu_custom_call.1} parent=1 // pred_fallthru
      _
    // Predicated region
    $region53: #{tpu_custom_call.1} parent=1 // pred_check
      _
    $region54: #{tpu_custom_call.1} parent=1 // pred_check_branch
      %575 = sbr.rel (0) target = $region56
    $region55: #{tpu_custom_call.1} parent=1 // pred_region
      %576 = dma.done [#allocation9], 256
    $region56: #{tpu_custom_call.1} parent=1 // pred_fallthru
      _
    %577 = vsyncpa [#allocation8], 1
    %578 = vsyncpa [#allocation11], 1
    %579 = vsyncpa [#allocation9], 1

</llo_original>
